<compile_context>
chip_gen: v5e
topology: v5e:2x2
jax: 0.10.0
libtpu: 0.0.40
codegen_flags: <defaults>
</compile_context>

<pallas_src>
import functools
import numpy as np
import jax
import jax.numpy as jnp
from jax.experimental import pallas as pl
from jax.experimental.pallas import tpu as pltpu

ANCHOR_MASKS = np.array([[6, 7, 8], [3, 4, 5], [0, 1, 2]], np.int64)

_LANE = 128
_MAX_TILE = 4096   # lanes per grid step; bounds per-step VMEM (<~6 MiB @ C5=85)


def _round_up(x, m):
    return ((x + m - 1) // m) * m


# ----------------------------------------------------------------------------
# Fused per-layer Pallas kernel: decode + bbox + background reduction
# ----------------------------------------------------------------------------
@functools.lru_cache(maxsize=None)
def _build_layer_kernel(C5, TILE, nchunks, H, W, T, apply_ignore,
                        ignore_thresh=0.5):
    """Returns a pallas_call for one layer.

    Inputs  : x    (C5, NCp)  channel-major logits (lane-padded)
              aux  (5,  NCp)  [gx, gy, aw/in_w, ah/in_h, valid]
              pos  (1,  NCp)  positive-cell mask
              tbox (T, 4)     all target boxes (xyxy), SMEM
    Outputs : xo   (C5, NCp)  decoded outputs (sigmoid on 0,1,4.., raw on 2,3)
              bb   (4,  NCp)  decoded boxes (bx,by,bw,bh)
              st   (nchunks, 128) per-chunk [bce*bkg, conf*bkg, bkg, conf>0.5]
    """
    NCp = TILE * nchunks
    inv_w = 1.0 / float(W)
    inv_h = 1.0 / float(H)

    def kernel(x_ref, aux_ref, pos_ref, tbox_ref, xo_ref, bb_ref, st_ref):
        x = x_ref[...]                                     # (C5, TILE) logits
        sig_xy = jax.nn.sigmoid(x[0:2, :])                 # x,y offsets
        raw_wh = x[2:4, :]                                 # w,h stay raw
        sig_co = jax.nn.sigmoid(x[4:C5, :])                # conf + classes

        # decoded "x" output (sliced stores, no concat, no wasted sigmoids)
        xo_ref[0:2, :] = sig_xy
        xo_ref[2:4, :] = raw_wh
        xo_ref[4:C5, :] = sig_co

        grid_xy = aux_ref[0:2, :]                          # gx, gy
        anch_wh = aux_ref[2:4, :]                          # aw/in_w, ah/in_h
        valid = aux_ref[4:5, :]                            # 1 for real cells
        pos = pos_ref[...]                                 # 1 for positives

        row2 = jax.lax.broadcasted_iota(jnp.int32, (2, TILE), 0)
        inv2 = jnp.where(row2 == 0, jnp.float32(inv_w), jnp.float32(inv_h))
        bxy = (sig_xy + grid_xy) * inv2                    # (2, TILE)
        bwh = jnp.exp(raw_wh) * anch_wh                    # (2, TILE)
        bb_ref[0:2, :] = bxy
        bb_ref[2:4, :] = bwh

        # ---------------- background mask + reductions (fused) -------------
        conf = sig_co[0:1, :]                              # objectness
        bkg = valid * (1.0 - pos)
        if apply_ignore:                                   # layer has positives
            half = bwh * 0.5
            pmin = bxy - half
            pmax = bxy + half
            parea = bwh[0:1, :] * bwh[1:2, :]
            max_iou = jnp.zeros_like(conf)
            for t in range(T):                             # static unroll
                tx0 = tbox_ref[t, 0]
                ty0 = tbox_ref[t, 1]
                tx1 = tbox_ref[t, 2]
                ty1 = tbox_ref[t, 3]
                iw = jnp.maximum(
                    jnp.minimum(pmax[0:1, :], tx1) - jnp.maximum(pmin[0:1, :], tx0), 0.0)
                ih = jnp.maximum(
                    jnp.minimum(pmax[1:2, :], ty1) - jnp.maximum(pmin[1:2, :], ty0), 0.0)
                inter = iw * ih
                tarea = (tx1 - tx0) * (ty1 - ty0)
                iou = inter / (tarea + parea - inter + 1e-16)
                max_iou = jnp.maximum(max_iou, iou)
            bkg = bkg * (max_iou <= ignore_thresh).astype(jnp.float32)

        # BCE(conf, 0) with PyTorch's log clamp at -100
        bce = -jnp.maximum(jnp.log(1.0 - conf), -100.0)
        s_bce = jnp.sum(bce * bkg)
        s_conf = jnp.sum(conf * bkg)
        s_cnt = jnp.sum(bkg)
        s_c50 = jnp.sum(jnp.where(conf > 0.5, valid, 0.0))

        col = jax.lax.broadcasted_iota(jnp.int32, (1, _LANE), 1)
        st_ref[...] = (jnp.where(col == 0, s_bce, 0.0)
                       + jnp.where(col == 1, s_conf, 0.0)
                       + jnp.where(col == 2, s_cnt, 0.0)
                       + jnp.where(col == 3, s_c50, 0.0))

    return pl.pallas_call(
        kernel,
        out_shape=(jax.ShapeDtypeStruct((C5, NCp), jnp.float32),
                   jax.ShapeDtypeStruct((4, NCp), jnp.float32),
                   jax.ShapeDtypeStruct((nchunks, _LANE), jnp.float32)),
        grid=(nchunks,),
        in_specs=[
            pl.BlockSpec((C5, TILE), lambda i: (0, i)),
            pl.BlockSpec((5, TILE), lambda i: (0, i)),
            pl.BlockSpec((1, TILE), lambda i: (0, i)),
            pl.BlockSpec(memory_space=pltpu.MemorySpace.SMEM),   # target boxes
        ],
        out_specs=(
            pl.BlockSpec((C5, TILE), lambda i: (0, i)),
            pl.BlockSpec((4, TILE), lambda i: (0, i)),
            pl.BlockSpec((1, _LANE), lambda i: (i, 0)),
        ),
        compiler_params=pltpu.CompilerParams(
            # lane chunks are fully independent (stats summed outside) so the
            # grid can be sharded across v7x's two TensorCores.
            dimension_semantics=("parallel",)),
    )


@functools.lru_cache(maxsize=None)
def _static_aux(N, A, H, W, anchors_key, in_h, in_w, NCp):
    """Grid offsets / scaled anchors / valid mask, cached as a device array."""
    anchors = np.asarray(anchors_key, np.float32).reshape(-1, 2)
    HW = H * W
    NC = N * A * HW
    gy, gx = np.meshgrid(np.arange(H, dtype=np.float32),
                         np.arange(W, dtype=np.float32), indexing="ij")
    a_idx = (np.arange(NC) // HW) % A
    aux = np.zeros((5, NCp), np.float32)
    aux[0, :NC] = np.tile(gx.reshape(-1), N * A)
    aux[1, :NC] = np.tile(gy.reshape(-1), N * A)
    aux[2, :NC] = anchors[a_idx, 0] / float(in_w)
    aux[3, :NC] = anchors[a_idx, 1] / float(in_h)
    aux[4, :NC] = 1.0
    return jnp.asarray(aux)


# ----------------------------------------------------------------------------
# glue helpers
# ----------------------------------------------------------------------------
def xywh_to_xyxy_np(xywh):
    return np.stack([xywh[:, 0] - xywh[:, 2] / 2, xywh[:, 1] - xywh[:, 3] / 2,
                     xywh[:, 0] + xywh[:, 2] / 2, xywh[:, 1] + xywh[:, 3] / 2],
                    axis=1).astype(np.float32)


def cal_iou_cols(b1, b2, eps=1e-16):
    minx = jnp.maximum(b1[0], b2[0]); miny = jnp.maximum(b1[1], b2[1])
    maxx = jnp.minimum(b1[2], b2[2]); maxy = jnp.minimum(b1[3], b2[3])
    w = jnp.maximum(maxx - minx, 0.0); h = jnp.maximum(maxy - miny, 0.0)
    inter = w * h
    a1 = (b1[2] - b1[0]) * (b1[3] - b1[1])
    a2 = (b2[2] - b2[0]) * (b2[3] - b2[1])
    return inter / (a1 + a2 - inter + eps)


def smooth_l1_sum(a, b):
    d = jnp.abs(a - b)
    return jnp.sum(jnp.where(d < 1.0, 0.5 * d * d, d - 0.5))


def bce_sum(p, t):
    logp = jnp.maximum(jnp.log(p), -100.0)
    log1p = jnp.maximum(jnp.log(1.0 - p), -100.0)
    return jnp.sum(-(t * logp + (1.0 - t) * log1p))


def parse_targets(targets, anchors, in_size, grid_sizes, num_classes):
    nobjs = targets.shape[0]
    A = ANCHOR_MASKS.shape[1]
    L = ANCHOR_MASKS.shape[0]
    anchors_n = anchors / float(in_size[0])
    iahwc = np.zeros((nobjs, 5), np.int64)
    txywho = np.zeros((nobjs, 5), np.float32)
    tc = np.zeros((nobjs, num_classes), np.float32)
    if nobjs == 0:
        return iahwc, np.zeros((0,), np.int64), txywho, tc
    iahwc[:, 0] = targets[:, 0].astype(np.int64)
    iahwc[:, 4] = targets[:, 1].astype(np.int64)
    tw, th = targets[:, 4], targets[:, 5]
    ious = []
    for a in anchors_n:                                   # lrca IoU (wh only)
        inter = np.minimum(a[0], tw) * np.minimum(a[1], th)
        ious.append(inter / (a[0] * a[1] + tw * th - inter + 1e-16))
    indices = np.stack(ious).argmax(axis=0)
    iahwc[:, 1] = indices % A
    layer_index = (L - 1 - indices // A).astype(np.int64)  # old-torch floor div
    bx = np.array([targets[i, 2] * grid_sizes[layer_index[i]] for i in range(nobjs)], np.float32)
    by = np.array([targets[i, 3] * grid_sizes[layer_index[i]] for i in range(nobjs)], np.float32)
    cx = np.floor(bx); cy = np.floor(by)
    iahwc[:, 2] = cy.astype(np.int64)
    iahwc[:, 3] = cx.astype(np.int64)
    txywho[:, 0] = bx - cx
    txywho[:, 1] = by - cy
    txywho[:, 2] = np.log(tw / anchors_n[indices, 0])
    txywho[:, 3] = np.log(th / anchors_n[indices, 1])
    txywho[:, 4] = 1.0
    tc[np.arange(nobjs), iahwc[:, 4]] = 1.0
    for i in range(nobjs):                                # merge co-located labels
        for j in range(i + 1, nobjs):
            if iahwc[i, 0] != iahwc[j, 0]:
                break
            if not np.array_equal(iahwc[i, 2:4], iahwc[j, 2:4]):
                continue
            mi = tc[i, :] == 1
            mj = tc[j, :] == 1
            tc[i, mj] = 1
            tc[j, mi] = 1
    return iahwc, layer_index, txywho, tc


# ----------------------------------------------------------------------------
# full forward
# ----------------------------------------------------------------------------
def yolov3_loss(xs, targets_np, in_size, anchors_np, num_classes):
    A = ANCHOR_MASKS.shape[1]
    C5 = 5 + num_classes
    N = int(xs[0].shape[0])
    grid_sizes = [int(x.shape[2]) for x in xs]

    iahwc, layer_index, txywho, tc = parse_targets(
        targets_np, anchors_np, in_size, grid_sizes, num_classes)
    nobjs = targets_np.shape[0]
    tboxes_all = (xywh_to_xyxy_np(targets_np[:, 2:]) if nobjs > 0
                  else np.zeros((1, 4), np.float32))
    T = int(tboxes_all.shape[0])
    tboxes_dev = jnp.asarray(tboxes_all)

    dev = []                                   # per-layer device values
    for l, x in enumerate(xs):
        H, W = int(x.shape[2]), int(x.shape[3])
        HW = H * W
        NC = N * A * HW
        TILE = min(_round_up(NC, _LANE), _MAX_TILE)
        NCp = _round_up(NC, TILE)
        nchunks = NCp // TILE

        # (N, A*C5, H, W) -> channel-major (C5, N*A*HW), lane-padded
        x_cm = jnp.asarray(x, jnp.float32).reshape(N, A, C5, HW)
        x_cm = x_cm.transpose(2, 0, 1, 3).reshape(C5, NC)
        if NCp != NC:
            x_cm = jnp.pad(x_cm, ((0, 0), (0, NCp - NC)))

        anch = anchors_np[ANCHOR_MASKS[l]].astype(np.float32)
        aux = _static_aux(N, A, H, W, tuple(map(tuple, anch.tolist())),
                          float(in_size[0]), float(in_size[1]), NCp)

        mask = layer_index == l
        idx = iahwc[mask] if nobjs > 0 else np.zeros((0, 5), np.int64)
        nl = int(idx.shape[0])

        pos_np = np.zeros((1, NCp), np.float32)
        flat_idx = None
        if nl > 0:
            flat_idx = ((idx[:, 0] * A + idx[:, 1]) * H + idx[:, 2]) * W + idx[:, 3]
            pos_np[0, flat_idx] = 1.0
        pos = jnp.asarray(pos_np)

        call = _build_layer_kernel(C5, TILE, nchunks, H, W, T, nl > 0)
        xo, bb, st = call(x_cm, aux, pos, tboxes_dev)
        stats = jnp.sum(st, axis=0)            # (128,): [bce, conf, cnt, c50]
        lbkg = stats[0]

        if nl > 0:
            txy_l = jnp.asarray(txywho[mask])
            tc_l = jnp.asarray(tc[mask])
            boxes_l = targets_np[mask, 2:]
            cols = jnp.asarray(flat_idx.astype(np.int32))
            pall = xo[:, cols].T               # (nl, C5) positive-cell gather
            pxywho = pall[:, :5]
            pc = pall[:, 5:]
            pbox_pos = bb[:, cols].T           # (nl, 4) xywh
            s = jnp.asarray(np.sqrt(2.0 - boxes_l[:, 2] * boxes_l[:, 3])
                            .reshape(nl, 1).astype(np.float32))
            lxywh = smooth_l1_sum(s * pxywho[:, :4], s * txy_l[:, :4])
            lo = bce_sum(pxywho[:, 4], txy_l[:, 4])
            lc = bce_sum(pc, tc_l)

            cls = jnp.asarray(idx[:, 4].astype(np.int32))
            cacc = jnp.mean((cls == jnp.argmax(pc, axis=-1)).astype(jnp.float32))
            conf_m = jnp.mean(pxywho[:, 4])
            conf50tp = jnp.sum((pxywho[:, 4] > 0.5).astype(jnp.float32))
            tb_xyxy = jnp.asarray(xywh_to_xyxy_np(boxes_l))
            pb_xyxy = jnp.concatenate(
                [pbox_pos[:, :2] - pbox_pos[:, 2:] * 0.5,
                 pbox_pos[:, :2] + pbox_pos[:, 2:] * 0.5], axis=1)
            iou = cal_iou_cols(tb_xyxy.T, pb_xyxy.T)
            rc50 = jnp.mean((iou > 0.5).astype(jnp.float32))
            rc75 = jnp.mean((iou > 0.75).astype(jnp.float32))
            aiou = jnp.mean(iou)
            acat = jnp.mean(pc[jnp.arange(nl), cls])
        else:
            zero = jnp.float32(0.0)
            lxywh = lo = lc = zero
            cacc = conf_m = conf50tp = rc50 = rc75 = aiou = acat = zero

        dev.append(dict(lxywh=lxywh, lo=lo, lc=lc, lbkg=lbkg,
                        s_conf=stats[1], s_cnt=stats[2], s_c50=stats[3],
                        cacc=cacc, conf=conf_m, conf50tp=conf50tp,
                        rc50=rc50, rc75=rc75, aiou=aiou, acat=acat))

    loss = sum(d['lxywh'] + d['lo'] + d['lc'] + d['lbkg'] for d in dev)

    # Single batched device->host pull for all metric scalars.
    host = jax.device_get(dev)
    metrics = []
    for d in host:
        bkgc = float(d['s_conf'] / d['s_cnt'])
        prec = float(d['conf50tp'] / (d['s_c50'] + 1e-6))
        metrics.append({'CACC': float(d['cacc']), 'CONF': float(d['conf']),
                        'BKGC': bkgc, 'PREC': prec,
                        'RC50': float(d['rc50']), 'RC75': float(d['rc75']),
                        'AIOU': float(d['aiou']), 'ACAT': float(d['acat']),
                        'LBOX': float(d['lxywh']), 'LOBJ': float(d['lo']),
                        'LCLS': float(d['lc']), 'LBKG': float(d['lbkg'])})
    # TODO(synk): only the forward pass is provided (no custom VJP for the
    # pallas_call); metrics are detached python floats as in the reference.
    return loss, metrics


# ----------------------------------------------------------------------------
if __name__ == "__main__":
    key = jax.random.PRNGKey(0)
    num_classes = 4
    A = 3
    C5 = 5 + num_classes
    N = 2
    in_size = (64, 64)                       # (height, width)
    grid_sizes = (4, 8, 16)
    anchors_np = np.array([[6, 8], [10, 13], [14, 18], [18, 24], [24, 30],
                           [30, 38], [38, 44], [46, 52], [56, 60]], np.float32)

    keys = jax.random.split(key, 3)
    xs = [jax.random.normal(k, (N, A * C5, g, g), jnp.float32) * 0.5
          for k, g in zip(keys, grid_sizes)]

    # targets: [batch, class, x, y, w, h] (normalized), sorted by batch index
    targets_np = np.array([
        [0, 1, 0.30, 0.40, 0.10, 0.15],
        [0, 2, 0.32, 0.42, 0.50, 0.60],
        [0, 0, 0.70, 0.20, 0.20, 0.25],
        [1, 3, 0.50, 0.50, 0.80, 0.90],
        [1, 1, 0.15, 0.80, 0.06, 0.08],
    ], np.float32)

    loss, metrics = yolov3_loss(xs, targets_np, in_size, anchors_np, num_classes)
    loss = jax.block_until_ready(loss)
    assert np.isfinite(float(loss)), "loss is not finite"
    assert len(metrics) == 3 and all('LBKG' in m for m in metrics)
    print("KERNEL_OK")
</pallas_src>

<mosaic_0001>
module attributes {stable_mosaic.version = 11 : i64} {
  func.func @kernel(%arg0: i32, %arg1: memref<9x128xf32, #tpu.memory_space<vmem>>, %arg2: memref<5x128xf32, #tpu.memory_space<vmem>>, %arg3: memref<1x128xf32, #tpu.memory_space<vmem>>, %arg4: memref<5x4xf32, #tpu.memory_space<smem>>, %arg5: memref<9x128xf32, #tpu.memory_space<vmem>>, %arg6: memref<4x128xf32, #tpu.memory_space<vmem>>, %arg7: memref<1x128xf32, #tpu.memory_space<vmem>>) attributes {dimension_semantics = [#tpu.dimension_semantics<parallel>], iteration_bounds = array<i64: 1>, scalar_prefetch = 0 : i64, scratch_operands = 0 : i64, tpu.core_type = #tpu.core_type<tc>, window_params = [{transform_indices = @transform_0, window_bounds = array<i64: 9, 128>}, {transform_indices = @transform_1, window_bounds = array<i64: 5, 128>}, {transform_indices = @transform_2, window_bounds = array<i64: 1, 128>}, {transform_indices = @transform_3, window_bounds = array<i64: 5, 4>}, {transform_indices = @transform_4, window_bounds = array<i64: 9, 128>}, {transform_indices = @transform_5, window_bounds = array<i64: 4, 128>}, {transform_indices = @transform_6, window_bounds = array<i64: 1, 128>}]} {
    %c0 = arith.constant 0 : index
    %c0_0 = arith.constant 0 : index
    %0 = vector.load %arg1[%c0, %c0_0] : memref<9x128xf32, #tpu.memory_space<vmem>>, vector<9x128xf32>
    %1 = vector.extract_strided_slice %0 {offsets = [0, 0], sizes = [2, 128], strides = [1, 1]} : vector<9x128xf32> to vector<2x128xf32>
    %2 = arith.negf %1 : vector<2x128xf32>
    %3 = math.exp %2 : vector<2x128xf32>
    %cst = arith.constant 1.000000e+00 : f32
    %4 = vector.broadcast %cst : f32 to vector<2x128xf32>
    %5 = arith.addf %4, %3 : vector<2x128xf32>
    %6 = arith.divf %4, %5 : vector<2x128xf32>
    %7 = vector.extract_strided_slice %0 {offsets = [2, 0], sizes = [2, 128], strides = [1, 1]} : vector<9x128xf32> to vector<2x128xf32>
    %8 = vector.extract_strided_slice %0 {offsets = [4, 0], sizes = [5, 128], strides = [1, 1]} : vector<9x128xf32> to vector<5x128xf32>
    %9 = arith.negf %8 : vector<5x128xf32>
    %10 = math.exp %9 : vector<5x128xf32>
    %cst_1 = arith.constant 1.000000e+00 : f32
    %11 = vector.broadcast %cst_1 : f32 to vector<5x128xf32>
    %12 = arith.addf %11, %10 : vector<5x128xf32>
    %13 = arith.divf %11, %12 : vector<5x128xf32>
    %c0_2 = arith.constant 0 : index
    %c0_3 = arith.constant 0 : index
    %14 = vector.load %arg5[%c0_2, %c0_3] : memref<9x128xf32, #tpu.memory_space<vmem>>, vector<2x128xf32>
    tpu.vector_store %arg5[%c0_2, %c0_3], %6 {strides = array<i32>} : memref<9x128xf32, #tpu.memory_space<vmem>>, vector<2x128xf32>,
    %c2 = arith.constant 2 : index
    %c0_4 = arith.constant 0 : index
    %15 = vector.load %arg5[%c2, %c0_4] : memref<9x128xf32, #tpu.memory_space<vmem>>, vector<2x128xf32>
    tpu.vector_store %arg5[%c2, %c0_4], %7 {strides = array<i32>} : memref<9x128xf32, #tpu.memory_space<vmem>>, vector<2x128xf32>,
    %c4 = arith.constant 4 : index
    %c0_5 = arith.constant 0 : index
    %16 = vector.load %arg5[%c4, %c0_5] : memref<9x128xf32, #tpu.memory_space<vmem>>, vector<5x128xf32>
    tpu.vector_store %arg5[%c4, %c0_5], %13 {strides = array<i32>} : memref<9x128xf32, #tpu.memory_space<vmem>>, vector<5x128xf32>,
    %c0_6 = arith.constant 0 : index
    %c0_7 = arith.constant 0 : index
    %17 = vector.load %arg2[%c0_6, %c0_7] : memref<5x128xf32, #tpu.memory_space<vmem>>, vector<2x128xf32>
    %c2_8 = arith.constant 2 : index
    %c0_9 = arith.constant 0 : index
    %18 = vector.load %arg2[%c2_8, %c0_9] : memref<5x128xf32, #tpu.memory_space<vmem>>, vector<2x128xf32>
    %c4_10 = arith.constant 4 : index
    %c0_11 = arith.constant 0 : index
    %19 = vector.load %arg2[%c4_10, %c0_11] : memref<5x128xf32, #tpu.memory_space<vmem>>, vector<1x128xf32>
    %c0_12 = arith.constant 0 : index
    %c0_13 = arith.constant 0 : index
    %20 = vector.load %arg3[%c0_12, %c0_13] : memref<1x128xf32, #tpu.memory_space<vmem>>, vector<1x128xf32>
    %21 = tpu.iota {dimensions = array<i32: 0>} : vector<2x128xi32>
    %c0_i32 = arith.constant 0 : i32
    %22 = vector.broadcast %c0_i32 : i32 to vector<2x128xi32>
    %23 = arith.cmpi eq, %21, %22 : vector<2x128xi32>
    %cst_14 = arith.constant 2.500000e-01 : f32
    %cst_15 = arith.constant 2.500000e-01 : f32
    %24 = vector.broadcast %cst_14 : f32 to vector<2x128xf32>
    %25 = vector.broadcast %cst_15 : f32 to vector<2x128xf32>
    %26 = arith.select %23, %24, %25 : vector<2x128xi1>, vector<2x128xf32>
    %27 = arith.addf %6, %17 : vector<2x128xf32>
    %28 = arith.mulf %27, %26 : vector<2x128xf32>
    %29 = math.exp %7 : vector<2x128xf32>
    %30 = arith.mulf %29, %18 : vector<2x128xf32>
    %c0_16 = arith.constant 0 : index
    %c0_17 = arith.constant 0 : index
    %31 = vector.load %arg6[%c0_16, %c0_17] : memref<4x128xf32, #tpu.memory_space<vmem>>, vector<2x128xf32>
    tpu.vector_store %arg6[%c0_16, %c0_17], %28 {strides = array<i32>} : memref<4x128xf32, #tpu.memory_space<vmem>>, vector<2x128xf32>,
    %c2_18 = arith.constant 2 : index
    %c0_19 = arith.constant 0 : index
    %32 = vector.load %arg6[%c2_18, %c0_19] : memref<4x128xf32, #tpu.memory_space<vmem>>, vector<2x128xf32>
    tpu.vector_store %arg6[%c2_18, %c0_19], %30 {strides = array<i32>} : memref<4x128xf32, #tpu.memory_space<vmem>>, vector<2x128xf32>,
    %33 = vector.extract_strided_slice %13 {offsets = [0, 0], sizes = [1, 128], strides = [1, 1]} : vector<5x128xf32> to vector<1x128xf32>
    %cst_20 = arith.constant 1.000000e+00 : f32
    %34 = vector.broadcast %cst_20 : f32 to vector<1x128xf32>
    %35 = arith.subf %34, %20 : vector<1x128xf32>
    %36 = arith.mulf %19, %35 : vector<1x128xf32>
    %cst_21 = arith.constant 5.000000e-01 : f32
    %37 = vector.broadcast %cst_21 : f32 to vector<2x128xf32>
    %38 = arith.mulf %30, %37 : vector<2x128xf32>
    %39 = arith.subf %28, %38 : vector<2x128xf32>
    %40 = arith.addf %28, %38 : vector<2x128xf32>
    %41 = vector.extract_strided_slice %30 {offsets = [0, 0], sizes = [1, 128], strides = [1, 1]} : vector<2x128xf32> to vector<1x128xf32>
    %42 = vector.extract_strided_slice %30 {offsets = [1, 0], sizes = [1, 128], strides = [1, 1]} : vector<2x128xf32> to vector<1x128xf32>
    %43 = arith.mulf %41, %42 : vector<1x128xf32>
    %cst_22 = arith.constant 0.000000e+00 : f32
    %44 = vector.broadcast %cst_22 : f32 to vector<1x128xf32>
    %c0_23 = arith.constant 0 : index
    %c0_24 = arith.constant 0 : index
    %45 = memref.load %arg4[%c0_23, %c0_24] : memref<5x4xf32, #tpu.memory_space<smem>>
    %c0_25 = arith.constant 0 : index
    %c1 = arith.constant 1 : index
    %46 = memref.load %arg4[%c0_25, %c1] : memref<5x4xf32, #tpu.memory_space<smem>>
    %c0_26 = arith.constant 0 : index
    %c2_27 = arith.constant 2 : index
    %47 = memref.load %arg4[%c0_26, %c2_27] : memref<5x4xf32, #tpu.memory_space<smem>>
    %c0_28 = arith.constant 0 : index
    %c3 = arith.constant 3 : index
    %48 = memref.load %arg4[%c0_28, %c3] : memref<5x4xf32, #tpu.memory_space<smem>>
    %49 = vector.extract_strided_slice %40 {offsets = [0, 0], sizes = [1, 128], strides = [1, 1]} : vector<2x128xf32> to vector<1x128xf32>
    %50 = vector.broadcast %47 : f32 to vector<1x128xf32>
    %51 = arith.minimumf %49, %50 : vector<1x128xf32>
    %52 = vector.extract_strided_slice %39 {offsets = [0, 0], sizes = [1, 128], strides = [1, 1]} : vector<2x128xf32> to vector<1x128xf32>
    %53 = vector.broadcast %45 : f32 to vector<1x128xf32>
    %54 = arith.maximumf %52, %53 : vector<1x128xf32>
    %55 = arith.subf %51, %54 : vector<1x128xf32>
    %cst_29 = arith.constant 0.000000e+00 : f32
    %56 = vector.broadcast %cst_29 : f32 to vector<1x128xf32>
    %57 = arith.maximumf %55, %56 : vector<1x128xf32>
    %58 = vector.extract_strided_slice %40 {offsets = [1, 0], sizes = [1, 128], strides = [1, 1]} : vector<2x128xf32> to vector<1x128xf32>
    %59 = vector.broadcast %48 : f32 to vector<1x128xf32>
    %60 = arith.minimumf %58, %59 : vector<1x128xf32>
    %61 = vector.extract_strided_slice %39 {offsets = [1, 0], sizes = [1, 128], strides = [1, 1]} : vector<2x128xf32> to vector<1x128xf32>
    %62 = vector.broadcast %46 : f32 to vector<1x128xf32>
    %63 = arith.maximumf %61, %62 : vector<1x128xf32>
    %64 = arith.subf %60, %63 : vector<1x128xf32>
    %cst_30 = arith.constant 0.000000e+00 : f32
    %65 = vector.broadcast %cst_30 : f32 to vector<1x128xf32>
    %66 = arith.maximumf %64, %65 : vector<1x128xf32>
    %67 = arith.mulf %57, %66 : vector<1x128xf32>
    %68 = arith.subf %47, %45 : f32
    %69 = arith.subf %48, %46 : f32
    %70 = arith.mulf %68, %69 : f32
    %71 = vector.broadcast %70 : f32 to vector<1x128xf32>
    %72 = arith.addf %71, %43 : vector<1x128xf32>
    %73 = arith.subf %72, %67 : vector<1x128xf32>
    %cst_31 = arith.constant 1.000000e-16 : f32
    %74 = vector.broadcast %cst_31 : f32 to vector<1x128xf32>
    %75 = arith.addf %73, %74 : vector<1x128xf32>
    %76 = arith.divf %67, %75 : vector<1x128xf32>
    %77 = arith.maximumf %44, %76 : vector<1x128xf32>
    %c1_32 = arith.constant 1 : index
    %c0_33 = arith.constant 0 : index
    %78 = memref.load %arg4[%c1_32, %c0_33] : memref<5x4xf32, #tpu.memory_space<smem>>
    %c1_34 = arith.constant 1 : index
    %c1_35 = arith.constant 1 : index
    %79 = memref.load %arg4[%c1_34, %c1_35] : memref<5x4xf32, #tpu.memory_space<smem>>
    %c1_36 = arith.constant 1 : index
    %c2_37 = arith.constant 2 : index
    %80 = memref.load %arg4[%c1_36, %c2_37] : memref<5x4xf32, #tpu.memory_space<smem>>
    %c1_38 = arith.constant 1 : index
    %c3_39 = arith.constant 3 : index
    %81 = memref.load %arg4[%c1_38, %c3_39] : memref<5x4xf32, #tpu.memory_space<smem>>
    %82 = vector.extract_strided_slice %40 {offsets = [0, 0], sizes = [1, 128], strides = [1, 1]} : vector<2x128xf32> to vector<1x128xf32>
    %83 = vector.broadcast %80 : f32 to vector<1x128xf32>
    %84 = arith.minimumf %82, %83 : vector<1x128xf32>
    %85 = vector.extract_strided_slice %39 {offsets = [0, 0], sizes = [1, 128], strides = [1, 1]} : vector<2x128xf32> to vector<1x128xf32>
    %86 = vector.broadcast %78 : f32 to vector<1x128xf32>
    %87 = arith.maximumf %85, %86 : vector<1x128xf32>
    %88 = arith.subf %84, %87 : vector<1x128xf32>
    %cst_40 = arith.constant 0.000000e+00 : f32
    %89 = vector.broadcast %cst_40 : f32 to vector<1x128xf32>
    %90 = arith.maximumf %88, %89 : vector<1x128xf32>
    %91 = vector.extract_strided_slice %40 {offsets = [1, 0], sizes = [1, 128], strides = [1, 1]} : vector<2x128xf32> to vector<1x128xf32>
    %92 = vector.broadcast %81 : f32 to vector<1x128xf32>
    %93 = arith.minimumf %91, %92 : vector<1x128xf32>
    %94 = vector.extract_strided_slice %39 {offsets = [1, 0], sizes = [1, 128], strides = [1, 1]} : vector<2x128xf32> to vector<1x128xf32>
    %95 = vector.broadcast %79 : f32 to vector<1x128xf32>
    %96 = arith.maximumf %94, %95 : vector<1x128xf32>
    %97 = arith.subf %93, %96 : vector<1x128xf32>
    %cst_41 = arith.constant 0.000000e+00 : f32
    %98 = vector.broadcast %cst_41 : f32 to vector<1x128xf32>
    %99 = arith.maximumf %97, %98 : vector<1x128xf32>
    %100 = arith.mulf %90, %99 : vector<1x128xf32>
    %101 = arith.subf %80, %78 : f32
    %102 = arith.subf %81, %79 : f32
    %103 = arith.mulf %101, %102 : f32
    %104 = vector.broadcast %103 : f32 to vector<1x128xf32>
    %105 = arith.addf %104, %43 : vector<1x128xf32>
    %106 = arith.subf %105, %100 : vector<1x128xf32>
    %cst_42 = arith.constant 1.000000e-16 : f32
    %107 = vector.broadcast %cst_42 : f32 to vector<1x128xf32>
    %108 = arith.addf %106, %107 : vector<1x128xf32>
    %109 = arith.divf %100, %108 : vector<1x128xf32>
    %110 = arith.maximumf %77, %109 : vector<1x128xf32>
    %c2_43 = arith.constant 2 : index
    %c0_44 = arith.constant 0 : index
    %111 = memref.load %arg4[%c2_43, %c0_44] : memref<5x4xf32, #tpu.memory_space<smem>>
    %c2_45 = arith.constant 2 : index
    %c1_46 = arith.constant 1 : index
    %112 = memref.load %arg4[%c2_45, %c1_46] : memref<5x4xf32, #tpu.memory_space<smem>>
    %c2_47 = arith.constant 2 : index
    %c2_48 = arith.constant 2 : index
    %113 = memref.load %arg4[%c2_47, %c2_48] : memref<5x4xf32, #tpu.memory_space<smem>>
    %c2_49 = arith.constant 2 : index
    %c3_50 = arith.constant 3 : index
    %114 = memref.load %arg4[%c2_49, %c3_50] : memref<5x4xf32, #tpu.memory_space<smem>>
    %115 = vector.extract_strided_slice %40 {offsets = [0, 0], sizes = [1, 128], strides = [1, 1]} : vector<2x128xf32> to vector<1x128xf32>
    %116 = vector.broadcast %113 : f32 to vector<1x128xf32>
    %117 = arith.minimumf %115, %116 : vector<1x128xf32>
    %118 = vector.extract_strided_slice %39 {offsets = [0, 0], sizes = [1, 128], strides = [1, 1]} : vector<2x128xf32> to vector<1x128xf32>
    %119 = vector.broadcast %111 : f32 to vector<1x128xf32>
    %120 = arith.maximumf %118, %119 : vector<1x128xf32>
    %121 = arith.subf %117, %120 : vector<1x128xf32>
    %cst_51 = arith.constant 0.000000e+00 : f32
    %122 = vector.broadcast %cst_51 : f32 to vector<1x128xf32>
    %123 = arith.maximumf %121, %122 : vector<1x128xf32>
    %124 = vector.extract_strided_slice %40 {offsets = [1, 0], sizes = [1, 128], strides = [1, 1]} : vector<2x128xf32> to vector<1x128xf32>
    %125 = vector.broadcast %114 : f32 to vector<1x128xf32>
    %126 = arith.minimumf %124, %125 : vector<1x128xf32>
    %127 = vector.extract_strided_slice %39 {offsets = [1, 0], sizes = [1, 128], strides = [1, 1]} : vector<2x128xf32> to vector<1x128xf32>
    %128 = vector.broadcast %112 : f32 to vector<1x128xf32>
    %129 = arith.maximumf %127, %128 : vector<1x128xf32>
    %130 = arith.subf %126, %129 : vector<1x128xf32>
    %cst_52 = arith.constant 0.000000e+00 : f32
    %131 = vector.broadcast %cst_52 : f32 to vector<1x128xf32>
    %132 = arith.maximumf %130, %131 : vector<1x128xf32>
    %133 = arith.mulf %123, %132 : vector<1x128xf32>
    %134 = arith.subf %113, %111 : f32
    %135 = arith.subf %114, %112 : f32
    %136 = arith.mulf %134, %135 : f32
    %137 = vector.broadcast %136 : f32 to vector<1x128xf32>
    %138 = arith.addf %137, %43 : vector<1x128xf32>
    %139 = arith.subf %138, %133 : vector<1x128xf32>
    %cst_53 = arith.constant 1.000000e-16 : f32
    %140 = vector.broadcast %cst_53 : f32 to vector<1x128xf32>
    %141 = arith.addf %139, %140 : vector<1x128xf32>
    %142 = arith.divf %133, %141 : vector<1x128xf32>
    %143 = arith.maximumf %110, %142 : vector<1x128xf32>
    %c3_54 = arith.constant 3 : index
    %c0_55 = arith.constant 0 : index
    %144 = memref.load %arg4[%c3_54, %c0_55] : memref<5x4xf32, #tpu.memory_space<smem>>
    %c3_56 = arith.constant 3 : index
    %c1_57 = arith.constant 1 : index
    %145 = memref.load %arg4[%c3_56, %c1_57] : memref<5x4xf32, #tpu.memory_space<smem>>
    %c3_58 = arith.constant 3 : index
    %c2_59 = arith.constant 2 : index
    %146 = memref.load %arg4[%c3_58, %c2_59] : memref<5x4xf32, #tpu.memory_space<smem>>
    %c3_60 = arith.constant 3 : index
    %c3_61 = arith.constant 3 : index
    %147 = memref.load %arg4[%c3_60, %c3_61] : memref<5x4xf32, #tpu.memory_space<smem>>
    %148 = vector.extract_strided_slice %40 {offsets = [0, 0], sizes = [1, 128], strides = [1, 1]} : vector<2x128xf32> to vector<1x128xf32>
    %149 = vector.broadcast %146 : f32 to vector<1x128xf32>
    %150 = arith.minimumf %148, %149 : vector<1x128xf32>
    %151 = vector.extract_strided_slice %39 {offsets = [0, 0], sizes = [1, 128], strides = [1, 1]} : vector<2x128xf32> to vector<1x128xf32>
    %152 = vector.broadcast %144 : f32 to vector<1x128xf32>
    %153 = arith.maximumf %151, %152 : vector<1x128xf32>
    %154 = arith.subf %150, %153 : vector<1x128xf32>
    %cst_62 = arith.constant 0.000000e+00 : f32
    %155 = vector.broadcast %cst_62 : f32 to vector<1x128xf32>
    %156 = arith.maximumf %154, %155 : vector<1x128xf32>
    %157 = vector.extract_strided_slice %40 {offsets = [1, 0], sizes = [1, 128], strides = [1, 1]} : vector<2x128xf32> to vector<1x128xf32>
    %158 = vector.broadcast %147 : f32 to vector<1x128xf32>
    %159 = arith.minimumf %157, %158 : vector<1x128xf32>
    %160 = vector.extract_strided_slice %39 {offsets = [1, 0], sizes = [1, 128], strides = [1, 1]} : vector<2x128xf32> to vector<1x128xf32>
    %161 = vector.broadcast %145 : f32 to vector<1x128xf32>
    %162 = arith.maximumf %160, %161 : vector<1x128xf32>
    %163 = arith.subf %159, %162 : vector<1x128xf32>
    %cst_63 = arith.constant 0.000000e+00 : f32
    %164 = vector.broadcast %cst_63 : f32 to vector<1x128xf32>
    %165 = arith.maximumf %163, %164 : vector<1x128xf32>
    %166 = arith.mulf %156, %165 : vector<1x128xf32>
    %167 = arith.subf %146, %144 : f32
    %168 = arith.subf %147, %145 : f32
    %169 = arith.mulf %167, %168 : f32
    %170 = vector.broadcast %169 : f32 to vector<1x128xf32>
    %171 = arith.addf %170, %43 : vector<1x128xf32>
    %172 = arith.subf %171, %166 : vector<1x128xf32>
    %cst_64 = arith.constant 1.000000e-16 : f32
    %173 = vector.broadcast %cst_64 : f32 to vector<1x128xf32>
    %174 = arith.addf %172, %173 : vector<1x128xf32>
    %175 = arith.divf %166, %174 : vector<1x128xf32>
    %176 = arith.maximumf %143, %175 : vector<1x128xf32>
    %c4_65 = arith.constant 4 : index
    %c0_66 = arith.constant 0 : index
    %177 = memref.load %arg4[%c4_65, %c0_66] : memref<5x4xf32, #tpu.memory_space<smem>>
    %c4_67 = arith.constant 4 : index
    %c1_68 = arith.constant 1 : index
    %178 = memref.load %arg4[%c4_67, %c1_68] : memref<5x4xf32, #tpu.memory_space<smem>>
    %c4_69 = arith.constant 4 : index
    %c2_70 = arith.constant 2 : index
    %179 = memref.load %arg4[%c4_69, %c2_70] : memref<5x4xf32, #tpu.memory_space<smem>>
    %c4_71 = arith.constant 4 : index
    %c3_72 = arith.constant 3 : index
    %180 = memref.load %arg4[%c4_71, %c3_72] : memref<5x4xf32, #tpu.memory_space<smem>>
    %181 = vector.extract_strided_slice %40 {offsets = [0, 0], sizes = [1, 128], strides = [1, 1]} : vector<2x128xf32> to vector<1x128xf32>
    %182 = vector.broadcast %179 : f32 to vector<1x128xf32>
    %183 = arith.minimumf %181, %182 : vector<1x128xf32>
    %184 = vector.extract_strided_slice %39 {offsets = [0, 0], sizes = [1, 128], strides = [1, 1]} : vector<2x128xf32> to vector<1x128xf32>
    %185 = vector.broadcast %177 : f32 to vector<1x128xf32>
    %186 = arith.maximumf %184, %185 : vector<1x128xf32>
    %187 = arith.subf %183, %186 : vector<1x128xf32>
    %cst_73 = arith.constant 0.000000e+00 : f32
    %188 = vector.broadcast %cst_73 : f32 to vector<1x128xf32>
    %189 = arith.maximumf %187, %188 : vector<1x128xf32>
    %190 = vector.extract_strided_slice %40 {offsets = [1, 0], sizes = [1, 128], strides = [1, 1]} : vector<2x128xf32> to vector<1x128xf32>
    %191 = vector.broadcast %180 : f32 to vector<1x128xf32>
    %192 = arith.minimumf %190, %191 : vector<1x128xf32>
    %193 = vector.extract_strided_slice %39 {offsets = [1, 0], sizes = [1, 128], strides = [1, 1]} : vector<2x128xf32> to vector<1x128xf32>
    %194 = vector.broadcast %178 : f32 to vector<1x128xf32>
    %195 = arith.maximumf %193, %194 : vector<1x128xf32>
    %196 = arith.subf %192, %195 : vector<1x128xf32>
    %cst_74 = arith.constant 0.000000e+00 : f32
    %197 = vector.broadcast %cst_74 : f32 to vector<1x128xf32>
    %198 = arith.maximumf %196, %197 : vector<1x128xf32>
    %199 = arith.mulf %189, %198 : vector<1x128xf32>
    %200 = arith.subf %179, %177 : f32
    %201 = arith.subf %180, %178 : f32
    %202 = arith.mulf %200, %201 : f32
    %203 = vector.broadcast %202 : f32 to vector<1x128xf32>
    %204 = arith.addf %203, %43 : vector<1x128xf32>
    %205 = arith.subf %204, %199 : vector<1x128xf32>
    %cst_75 = arith.constant 1.000000e-16 : f32
    %206 = vector.broadcast %cst_75 : f32 to vector<1x128xf32>
    %207 = arith.addf %205, %206 : vector<1x128xf32>
    %208 = arith.divf %199, %207 : vector<1x128xf32>
    %209 = arith.maximumf %176, %208 : vector<1x128xf32>
    %cst_76 = arith.constant 5.000000e-01 : f32
    %210 = vector.broadcast %cst_76 : f32 to vector<1x128xf32>
    %211 = arith.cmpf ole, %209, %210 : vector<1x128xf32>
    %212 = arith.extui %211 : vector<1x128xi1> to vector<1x128xi32>
    %213 = arith.sitofp %212 : vector<1x128xi32> to vector<1x128xf32>
    %214 = arith.mulf %36, %213 : vector<1x128xf32>
    %cst_77 = arith.constant 1.000000e+00 : f32
    %215 = vector.broadcast %cst_77 : f32 to vector<1x128xf32>
    %216 = arith.subf %215, %33 : vector<1x128xf32>
    %217 = math.log %216 : vector<1x128xf32>
    %cst_78 = arith.constant -1.000000e+02 : f32
    %218 = vector.broadcast %cst_78 : f32 to vector<1x128xf32>
    %219 = arith.maximumf %217, %218 : vector<1x128xf32>
    %cst_79 = arith.constant 0.000000e+00 : f32
    %220 = vector.broadcast %cst_79 : f32 to vector<1x128xf32>
    %221 = arith.subf %220, %219 : vector<1x128xf32>
    %222 = arith.mulf %221, %214 : vector<1x128xf32>
    %223 = vector.shape_cast %222 : vector<1x128xf32> to vector<1x1x128xf32>
    %cst_80 = arith.constant dense<0.000000e+00> : vector<1xf32>
    %224 = vector.multi_reduction <add>, %223, %cst_80 [1, 2] : vector<1x1x128xf32> to vector<1xf32>
    %225 = vector.shape_cast %224 : vector<1xf32> to vector<1x1x1xf32>
    %226 = vector.extract %225[0, 0, 0] : f32 from vector<1x1x1xf32>
    %227 = arith.mulf %33, %214 : vector<1x128xf32>
    %228 = vector.shape_cast %227 : vector<1x128xf32> to vector<1x1x128xf32>
    %cst_81 = arith.constant dense<0.000000e+00> : vector<1xf32>
    %229 = vector.multi_reduction <add>, %228, %cst_81 [1, 2] : vector<1x1x128xf32> to vector<1xf32>
    %230 = vector.shape_cast %229 : vector<1xf32> to vector<1x1x1xf32>
    %231 = vector.extract %230[0, 0, 0] : f32 from vector<1x1x1xf32>
    %232 = vector.shape_cast %214 : vector<1x128xf32> to vector<1x1x128xf32>
    %cst_82 = arith.constant dense<0.000000e+00> : vector<1xf32>
    %233 = vector.multi_reduction <add>, %232, %cst_82 [1, 2] : vector<1x1x128xf32> to vector<1xf32>
    %234 = vector.shape_cast %233 : vector<1xf32> to vector<1x1x1xf32>
    %235 = vector.extract %234[0, 0, 0] : f32 from vector<1x1x1xf32>
    %cst_83 = arith.constant 5.000000e-01 : f32
    %236 = vector.broadcast %cst_83 : f32 to vector<1x128xf32>
    %237 = arith.cmpf ogt, %33, %236 : vector<1x128xf32>
    %cst_84 = arith.constant 0.000000e+00 : f32
    %238 = vector.broadcast %cst_84 : f32 to vector<1x128xf32>
    %239 = arith.select %237, %19, %238 : vector<1x128xi1>, vector<1x128xf32>
    %240 = vector.shape_cast %239 : vector<1x128xf32> to vector<1x1x128xf32>
    %cst_85 = arith.constant dense<0.000000e+00> : vector<1xf32>
    %241 = vector.multi_reduction <add>, %240, %cst_85 [1, 2] : vector<1x1x128xf32> to vector<1xf32>
    %242 = vector.shape_cast %241 : vector<1xf32> to vector<1x1x1xf32>
    %243 = vector.extract %242[0, 0, 0] : f32 from vector<1x1x1xf32>
    %244 = tpu.iota {dimensions = array<i32: 1>} : vector<1x128xi32>
    %c0_i32_86 = arith.constant 0 : i32
    %245 = vector.broadcast %c0_i32_86 : i32 to vector<1x128xi32>
    %246 = arith.cmpi eq, %244, %245 : vector<1x128xi32>
    %cst_87 = arith.constant 0.000000e+00 : f32
    %247 = vector.broadcast %226 : f32 to vector<1x128xf32>
    %248 = vector.broadcast %cst_87 : f32 to vector<1x128xf32>
    %249 = arith.select %246, %247, %248 : vector<1x128xi1>, vector<1x128xf32>
    %c1_i32 = arith.constant 1 : i32
    %250 = vector.broadcast %c1_i32 : i32 to vector<1x128xi32>
    %251 = arith.cmpi eq, %244, %250 : vector<1x128xi32>
    %cst_88 = arith.constant 0.000000e+00 : f32
    %252 = vector.broadcast %231 : f32 to vector<1x128xf32>
    %253 = vector.broadcast %cst_88 : f32 to vector<1x128xf32>
    %254 = arith.select %251, %252, %253 : vector<1x128xi1>, vector<1x128xf32>
    %255 = arith.addf %249, %254 : vector<1x128xf32>
    %c2_i32 = arith.constant 2 : i32
    %256 = vector.broadcast %c2_i32 : i32 to vector<1x128xi32>
    %257 = arith.cmpi eq, %244, %256 : vector<1x128xi32>
    %cst_89 = arith.constant 0.000000e+00 : f32
    %258 = vector.broadcast %235 : f32 to vector<1x128xf32>
    %259 = vector.broadcast %cst_89 : f32 to vector<1x128xf32>
    %260 = arith.select %257, %258, %259 : vector<1x128xi1>, vector<1x128xf32>
    %261 = arith.addf %255, %260 : vector<1x128xf32>
    %c3_i32 = arith.constant 3 : i32
    %262 = vector.broadcast %c3_i32 : i32 to vector<1x128xi32>
    %263 = arith.cmpi eq, %244, %262 : vector<1x128xi32>
    %cst_90 = arith.constant 0.000000e+00 : f32
    %264 = vector.broadcast %243 : f32 to vector<1x128xf32>
    %265 = vector.broadcast %cst_90 : f32 to vector<1x128xf32>
    %266 = arith.select %263, %264, %265 : vector<1x128xi1>, vector<1x128xf32>
    %267 = arith.addf %261, %266 : vector<1x128xf32>
    %c0_91 = arith.constant 0 : index
    %c0_92 = arith.constant 0 : index
    %268 = vector.load %arg7[%c0_91, %c0_92] : memref<1x128xf32, #tpu.memory_space<vmem>>, vector<1x128xf32>
    tpu.vector_store %arg7[%c0_91, %c0_92], %267 {strides = array<i32>} : memref<1x128xf32, #tpu.memory_space<vmem>>, vector<1x128xf32>,
    return
  }
  func.func @transform_0(%arg0: i32) -> (i32, i32) {
    %c0_i32 = arith.constant 0 : i32
    %c0_i32_0 = arith.constant 0 : i32
    return %c0_i32, %arg0 : i32, i32
  }
  func.func @transform_1(%arg0: i32) -> (i32, i32) {
    %c0_i32 = arith.constant 0 : i32
    %c0_i32_0 = arith.constant 0 : i32
    return %c0_i32, %arg0 : i32, i32
  }
  func.func @transform_2(%arg0: i32) -> (i32, i32) {
    %c0_i32 = arith.constant 0 : i32
    %c0_i32_0 = arith.constant 0 : i32
    return %c0_i32, %arg0 : i32, i32
  }
  func.func @transform_3(%arg0: i32) -> (i32, i32) {
    %c0_i32 = arith.constant 0 : i32
    %c0_i32_0 = arith.constant 0 : i32
    %c0_i32_1 = arith.constant 0 : i32
    return %c0_i32, %c0_i32_0 : i32, i32
  }
  func.func @transform_4(%arg0: i32) -> (i32, i32) {
    %c0_i32 = arith.constant 0 : i32
    %c0_i32_0 = arith.constant 0 : i32
    return %c0_i32, %arg0 : i32, i32
  }
  func.func @transform_5(%arg0: i32) -> (i32, i32) {
    %c0_i32 = arith.constant 0 : i32
    %c0_i32_0 = arith.constant 0 : i32
    return %c0_i32, %arg0 : i32, i32
  }
  func.func @transform_6(%arg0: i32) -> (i32, i32) {
    %c0_i32 = arith.constant 0 : i32
    %c0_i32_0 = arith.constant 0 : i32
    return %arg0, %c0_i32 : i32, i32
  }
}

</mosaic_0001>

<llo_original>
// kernel: tpu_custom_call.1
$region0: #{tpu_custom_call.1}
  #allocation0 [shape = 'u32[]', space=smem, size = 0x4, offset = 0x4, fixed_abs, tag = 'smem constant byte address 0x4 - core index']
  #allocation1 [shape = 'u32[72,128]{1,0:T(1,128)}', space=vmem, size = 0x9000, scoped, tag = 'internal scratch']
  %s0 = inlined_call_operand.hbm [shape: f32[9,128], index: 0, kind: input, shape index: {}]
  %s1 = inlined_call_operand.vmem [shape: f32[5,128], index: 1, kind: input, shape index: {}]
  %s2 = inlined_call_operand.vmem [shape: f32[1,128], index: 2, kind: input, shape index: {}]
  %s3 = inlined_call_operand.vmem [shape: f32[5,4], index: 3, kind: input, shape index: {}]
  %s4 = inlined_call_operand.hbm [shape: f32[9,128], index: 4, kind: output, shape index: {0}]
  %s5 = inlined_call_operand.hbm [shape: f32[4,128], index: 5, kind: output, shape index: {1}]
  %s6 = inlined_call_operand.hbm [shape: f32[1,128], index: 6, kind: output, shape index: {2}]
  %7 = xla_tuple %s4, %s5, %s6
  %s8 = sld [smem:[#allocation0]]
  $region50: #{tpu_custom_call.1} parent=0
    _
  %s10 = ssub.s32 1, %s8
  %s11 = scalar_select 0, %s10, %s8
  $region1: #{tpu_custom_call.1} parent=0
    #allocation2 [shape = 'u8[8192]{0}', space=vmem, size = 0x2000, scoped, tag = 'input window, operand 0, single buffered']
    #allocation3 [shape = 's32[1]{0}', space=sflag, size = 0x4, scoped, tag = 'scoped memory for tpu_custom_call.1']
    #allocation4 [shape = 's32[1]{0}', space=sflag, size = 0x4, scoped, tag = 'scoped memory for tpu_custom_call.1']
    #allocation5 [shape = 's32[1]{0}', space=sflag, size = 0x4, scoped, tag = 'scoped memory for tpu_custom_call.1']
    #allocation6 [shape = 'u8[4096]{0}', space=smem, size = 0x1000, scoped, tag = 'input window, operand 3, single buffered']
    #allocation7 [shape = 'u8[8192]{0}', space=vmem, size = 0x2000, scoped, tag = 'output window, operand 0, single buffered']
    #allocation8 [shape = 'u8[2048]{0}', space=vmem, size = 0x800, scoped, tag = 'output window, operand 1, single buffered']
    #allocation9 [shape = 's32[1]{0}', space=sflag, size = 0x4, scoped, tag = 'scoped memory for tpu_custom_call.1']
    #allocation10 [shape = 'u8[512]{0}', space=vmem, size = 0x400, scoped, tag = 'output window, operand 2, single buffered']
    %12 = vsyncpa [#allocation3], 0
    %13 = vsyncpa [#allocation5], 0
    %14 = vsyncpa [#allocation4], 0
    %15 = vsyncpa [#allocation9], 0
    // Predicated region
    $region2: #{tpu_custom_call.1} parent=1 // pred_check
      _
    $region3: #{tpu_custom_call.1} parent=1 // pred_check_branch
      %17 = sbr.rel (0) target = $region5
    $region4: #{tpu_custom_call.1} parent=1 // pred_region
      %19 = vsyncadd [#allocation3], 0
      %s20 = sshll.u32 %s0, 4
      %s21 = int_to_ptr.hbm [resolvable:$true] %s20
      %s22 = sshll.u32 [#allocation2], 4
      %s23 = int_to_ptr.vmem [resolvable:$true] %s22
      %28 = dma.hbm_to_vmem [thread:$0]  %s21, 256, %s23, [#allocation3], 128, 128, 8
    $region5: #{tpu_custom_call.1} parent=1 // pred_fallthru
      _
    // Predicated region
    $region6: #{tpu_custom_call.1} parent=1 // pred_check
      _
    $region7: #{tpu_custom_call.1} parent=1 // pred_check_branch
      %30 = sbr.rel (0) target = $region9
    $region8: #{tpu_custom_call.1} parent=1 // pred_region
      _
    $region9: #{tpu_custom_call.1} parent=1 // pred_fallthru
      _
    // Predicated region
    $region10: #{tpu_custom_call.1} parent=1 // pred_check
      _
    $region11: #{tpu_custom_call.1} parent=1 // pred_check_branch
      %32 = sbr.rel (0) target = $region13
    $region12: #{tpu_custom_call.1} parent=1 // pred_region
      _
    $region13: #{tpu_custom_call.1} parent=1 // pred_fallthru
      _
    // Predicated region
    $region14: #{tpu_custom_call.1} parent=1 // pred_check
      _
    $region15: #{tpu_custom_call.1} parent=1 // pred_check_branch
      %34 = sbr.rel (0) target = $region17
    $region16: #{tpu_custom_call.1} parent=1 // pred_region
      %36 = vsyncadd [#allocation5], 0
      %s38 = sshll.u32 %s3, 4
      %s39 = int_to_ptr.vmem [resolvable:$true] %s38
      %41 = dma.vmem_to_smem %s39, 128, [#allocation6], [#allocation5]
    $region17: #{tpu_custom_call.1} parent=1 // pred_fallthru
      _
    // Predicated region
    $region18: #{tpu_custom_call.1} parent=1 // pred_check
      _
    $region19: #{tpu_custom_call.1} parent=1 // pred_check_branch
      %43 = sbr.rel (0) target = $region21
    $region20: #{tpu_custom_call.1} parent=1 // pred_region
      %45 = dma.done [#allocation3], 256
    $region21: #{tpu_custom_call.1} parent=1 // pred_fallthru
      _
    // Predicated region
    $region22: #{tpu_custom_call.1} parent=1 // pred_check
      _
    $region23: #{tpu_custom_call.1} parent=1 // pred_check_branch
      %47 = sbr.rel (0) target = $region25
    $region24: #{tpu_custom_call.1} parent=1 // pred_region
      %49 = dma.done [#allocation5], 128
    $region25: #{tpu_custom_call.1} parent=1 // pred_fallthru
      _
    %50 = sfence
    %v51 = vld [vmem:[#allocation2] sm:$0xff]
    %v52 = vld [vmem:[#allocation2 + $0x8] sm:$0x1]
    %v53 = vxor.u32 %v51, 2147483648
    %v54 = vmul.f32 %v53, 1.442695
    %v55 = vpow.pop %v54
    %v56 = vadd.f32 %v55, 1.0
    %v57 = vrcp.pop %v56
    %v58 = vmul.f32 %v56, %v57
    %v59 = vsub.f32 1.0, %v58
    %v60 = vmul.f32 %v57, %v59
    %v61 = vadd.f32 %v57, %v60
    %vm62 = vweird.f32 %v56
    %vm63 = vweird.f32 %v57
    %vm64 = vmor %vm62, %vm63
    %v65 = vsel %vm64, %v57, %v61
    %v66 = vand.u32 2147483647, %v56
    %vm67 = vcmp.eq.f32.partialorder %v66, 8.507059e+37
    %v68 = vand.u32 %v56, 2147483648
    %v69 = vor.u32 1.1754944e-38, %v68
    %v70 = vsel %vm67, %v69, %v65
    %v71 = vmul.f32 1.0, %v70
    %v72 = vxor.u32 %v52, 2147483648
    %v73 = vmul.f32 %v72, 1.442695
    %v74 = vpow.pop %v73
    %v75 = vadd.f32 %v74, 1.0
    %v76 = vrcp.pop %v75
    %v77 = vmul.f32 %v75, %v76
    %v78 = vsub.f32 1.0, %v77
    %v79 = vmul.f32 %v76, %v78
    %v80 = vadd.f32 %v76, %v79
    %vm81 = vweird.f32 %v75
    %vm82 = vweird.f32 %v76
    %vm83 = vmor %vm81, %vm82
    %v84 = vsel %vm83, %v76, %v80
    %v85 = vand.u32 2147483647, %v75
    %vm86 = vcmp.eq.f32.partialorder %v85, 8.507059e+37
    %v87 = vand.u32 %v75, 2147483648
    %v88 = vor.u32 1.1754944e-38, %v87
    %v89 = vsel %vm86, %v88, %v84
    %v90 = vmul.f32 1.0, %v89
    %91 = vst [vmem:[#allocation7] sm:$0x3] %v71
    %92 = vst [vmem:[#allocation7] sm:$0xc] %v51
    %93 = vst [vmem:[#allocation7] sm:$0xf0] %v71
    %94 = vst [vmem:[#allocation7 + $0x8] sm:$0x1] %v90
    %v95 = vld [vmem:[%s1] sm:$0x3]
    %v96 = vld [vmem:[%s1 + $0x2] sm:$0x3]
    %v97 = vld [vmem:[%s1 + $0x4] sm:$0x1]
    %v98 = vld [vmem:[%s2] sm:$0x1]
    %v99 = vadd.f32 %v71, %v95
    %v100 = vmul.f32 %v99, 0.25
    %v101 = vmul.f32 %v51, 1.442695
    %v102 = vpow.pop %v101
    %v104 = vrot.slane %v96, 6
    %v106 = vmul.f32 %v102, %v104
    %107 = vst [vmem:[#allocation8] sm:$0x3] %v100
    %108 = vst [vmem:[#allocation8] sm:$0xc] %v106
    %v109 = vsub.f32 1.0, %v98
    %v110 = vmul.f32 %v97, %v109
    %v111 = vmul.f32 %v106, 0.5
    %v113 = vrot.slane %v111, 2
    %v115 = vsub.f32 %v100, %v113
    %v116 = vadd.f32 %v100, %v113
    %v118 = vrot.slane %v106, 1
    %v120 = vmul.f32 %v106, %v118
    %s121 = sld [smem:[#allocation6]]
    %s122 = sld [smem:[#allocation6 + $0x1]]
    %s123 = sld [smem:[#allocation6 + $0x2]]
    %s124 = sld [smem:[#allocation6 + $0x3]]
    %v125 = vstv %s123
    %v126 = vmin.f32 %v116, %v125
    %v127 = vstv %s121
    %v128 = vmax.f32 %v115, %v127
    %v129 = vsub.f32 %v126, %v128
    %v130 = vmax.f32 %v129, 0.0
    %v131 = vstv %s124
    %v132 = vmin.f32 %v116, %v131
    %v133 = vstv %s122
    %v134 = vmax.f32 %v115, %v133
    %v135 = vsub.f32 %v132, %v134
    %v136 = vmax.f32 %v135, 0.0
    %v138 = vrot.slane %v136, 1
    %v140 = vmul.f32 %v130, %v138
    %s141 = ssub.f32 %s123, %s121
    %s142 = ssub.f32 %s124, %s122
    %s143 = smul.f32 %s141, %s142
    %v144 = vstv %s143
    %v145 = vadd.f32 %v144, %v120
    %v147 = vrot.slane %v140, 6
    %v149 = vsub.f32 %v145, %v147
    %v150 = vadd.f32 %v149, 1e-16
    %v152 = vrot.slane %v150, 2
    %v154 = vrcp.pop %v152
    %v155 = vmul.f32 %v152, %v154
    %v156 = vsub.f32 1.0, %v155
    %v157 = vmul.f32 %v154, %v156
    %v158 = vadd.f32 %v154, %v157
    %vm159 = vweird.f32 %v152
    %vm160 = vweird.f32 %v154
    %vm161 = vmor %vm159, %vm160
    %v162 = vsel %vm161, %v154, %v158
    %v163 = vand.u32 2147483647, %v152
    %vm164 = vcmp.eq.f32.partialorder %v163, 8.507059e+37
    %v165 = vand.u32 %v152, 2147483648
    %v166 = vor.u32 1.1754944e-38, %v165
    %v167 = vsel %vm164, %v166, %v162
    %v168 = vmul.f32 %v140, %v167
    %v169 = vmax.f32 %v168, 0.0
    %s170 = sld [smem:[#allocation6 + $0x80]]
    %s171 = sld [smem:[#allocation6 + $0x81]]
    %s172 = sld [smem:[#allocation6 + $0x82]]
    %s173 = sld [smem:[#allocation6 + $0x83]]
    %v174 = vstv %s172
    %v175 = vmin.f32 %v116, %v174
    %v176 = vstv %s170
    %v177 = vmax.f32 %v115, %v176
    %v178 = vsub.f32 %v175, %v177
    %v179 = vmax.f32 %v178, 0.0
    %v180 = vstv %s173
    %v181 = vmin.f32 %v116, %v180
    %v182 = vstv %s171
    %v183 = vmax.f32 %v115, %v182
    %v184 = vsub.f32 %v181, %v183
    %v185 = vmax.f32 %v184, 0.0
    %v187 = vrot.slane %v185, 1
    %v189 = vmul.f32 %v179, %v187
    %s190 = ssub.f32 %s172, %s170
    %s191 = ssub.f32 %s173, %s171
    %s192 = smul.f32 %s190, %s191
    %v193 = vstv %s192
    %v194 = vadd.f32 %v193, %v120
    %v196 = vrot.slane %v189, 6
    %v198 = vsub.f32 %v194, %v196
    %v199 = vadd.f32 %v198, 1e-16
    %v201 = vrot.slane %v199, 2
    %v203 = vrcp.pop %v201
    %v204 = vmul.f32 %v201, %v203
    %v205 = vsub.f32 1.0, %v204
    %v206 = vmul.f32 %v203, %v205
    %v207 = vadd.f32 %v203, %v206
    %vm208 = vweird.f32 %v201
    %vm209 = vweird.f32 %v203
    %vm210 = vmor %vm208, %vm209
    %v211 = vsel %vm210, %v203, %v207
    %v212 = vand.u32 2147483647, %v201
    %vm213 = vcmp.eq.f32.partialorder %v212, 8.507059e+37
    %v214 = vand.u32 %v201, 2147483648
    %v215 = vor.u32 1.1754944e-38, %v214
    %v216 = vsel %vm213, %v215, %v211
    %v217 = vmul.f32 %v189, %v216
    %v218 = vmax.f32 %v169, %v217
    %s219 = sld [smem:[#allocation6 + $0x100]]
    %s220 = sld [smem:[#allocation6 + $0x101]]
    %s221 = sld [smem:[#allocation6 + $0x102]]
    %s222 = sld [smem:[#allocation6 + $0x103]]
    %v223 = vstv %s221
    %v224 = vmin.f32 %v116, %v223
    %v225 = vstv %s219
    %v226 = vmax.f32 %v115, %v225
    %v227 = vsub.f32 %v224, %v226
    %v228 = vmax.f32 %v227, 0.0
    %v229 = vstv %s222
    %v230 = vmin.f32 %v116, %v229
    %v231 = vstv %s220
    %v232 = vmax.f32 %v115, %v231
    %v233 = vsub.f32 %v230, %v232
    %v234 = vmax.f32 %v233, 0.0
    %v236 = vrot.slane %v234, 1
    %v238 = vmul.f32 %v228, %v236
    %s239 = ssub.f32 %s221, %s219
    %s240 = ssub.f32 %s222, %s220
    %s241 = smul.f32 %s239, %s240
    %v242 = vstv %s241
    %v243 = vadd.f32 %v242, %v120
    %v245 = vrot.slane %v238, 6
    %v247 = vsub.f32 %v243, %v245
    %v248 = vadd.f32 %v247, 1e-16
    %v250 = vrot.slane %v248, 2
    %v252 = vrcp.pop %v250
    %v253 = vmul.f32 %v250, %v252
    %v254 = vsub.f32 1.0, %v253
    %v255 = vmul.f32 %v252, %v254
    %v256 = vadd.f32 %v252, %v255
    %vm257 = vweird.f32 %v250
    %vm258 = vweird.f32 %v252
    %vm259 = vmor %vm257, %vm258
    %v260 = vsel %vm259, %v252, %v256
    %v261 = vand.u32 2147483647, %v250
    %vm262 = vcmp.eq.f32.partialorder %v261, 8.507059e+37
    %v263 = vand.u32 %v250, 2147483648
    %v264 = vor.u32 1.1754944e-38, %v263
    %v265 = vsel %vm262, %v264, %v260
    %v266 = vmul.f32 %v238, %v265
    %v267 = vmax.f32 %v218, %v266
    %s268 = sld [smem:[#allocation6 + $0x180]]
    %s269 = sld [smem:[#allocation6 + $0x181]]
    %s270 = sld [smem:[#allocation6 + $0x182]]
    %s271 = sld [smem:[#allocation6 + $0x183]]
    %v272 = vstv %s270
    %v273 = vmin.f32 %v116, %v272
    %v274 = vstv %s268
    %v275 = vmax.f32 %v115, %v274
    %v276 = vsub.f32 %v273, %v275
    %v277 = vmax.f32 %v276, 0.0
    %v278 = vstv %s271
    %v279 = vmin.f32 %v116, %v278
    %v280 = vstv %s269
    %v281 = vmax.f32 %v115, %v280
    %v282 = vsub.f32 %v279, %v281
    %v283 = vmax.f32 %v282, 0.0
    %v285 = vrot.slane %v283, 1
    %v287 = vmul.f32 %v277, %v285
    %s288 = ssub.f32 %s270, %s268
    %s289 = ssub.f32 %s271, %s269
    %s290 = smul.f32 %s288, %s289
    %v291 = vstv %s290
    %v292 = vadd.f32 %v291, %v120
    %v294 = vrot.slane %v287, 6
    %v296 = vsub.f32 %v292, %v294
    %v297 = vadd.f32 %v296, 1e-16
    %v299 = vrot.slane %v297, 2
    %v301 = vrcp.pop %v299
    %v302 = vmul.f32 %v299, %v301
    %v303 = vsub.f32 1.0, %v302
    %v304 = vmul.f32 %v301, %v303
    %v305 = vadd.f32 %v301, %v304
    %vm306 = vweird.f32 %v299
    %vm307 = vweird.f32 %v301
    %vm308 = vmor %vm306, %vm307
    %v309 = vsel %vm308, %v301, %v305
    %v310 = vand.u32 2147483647, %v299
    %vm311 = vcmp.eq.f32.partialorder %v310, 8.507059e+37
    %v312 = vand.u32 %v299, 2147483648
    %v313 = vor.u32 1.1754944e-38, %v312
    %v314 = vsel %vm311, %v313, %v309
    %v315 = vmul.f32 %v287, %v314
    %v316 = vmax.f32 %v267, %v315
    %s317 = sld [smem:[#allocation6 + $0x200]]
    %s318 = sld [smem:[#allocation6 + $0x201]]
    %s319 = sld [smem:[#allocation6 + $0x202]]
    %s320 = sld [smem:[#allocation6 + $0x203]]
    %v321 = vstv %s319
    %v322 = vmin.f32 %v116, %v321
    %v323 = vstv %s317
    %v324 = vmax.f32 %v115, %v323
    %v325 = vsub.f32 %v322, %v324
    %v326 = vmax.f32 %v325, 0.0
    %v327 = vstv %s320
    %v328 = vmin.f32 %v116, %v327
    %v329 = vstv %s318
    %v330 = vmax.f32 %v115, %v329
    %v331 = vsub.f32 %v328, %v330
    %v332 = vmax.f32 %v331, 0.0
    %v334 = vrot.slane %v332, 1
    %v336 = vmul.f32 %v326, %v334
    %s337 = ssub.f32 %s319, %s317
    %s338 = ssub.f32 %s320, %s318
    %s339 = smul.f32 %s337, %s338
    %v340 = vstv %s339
    %v341 = vadd.f32 %v340, %v120
    %v343 = vrot.slane %v336, 6
    %v345 = vsub.f32 %v341, %v343
    %v346 = vadd.f32 %v345, 1e-16
    %v348 = vrot.slane %v346, 2
    %v350 = vrcp.pop %v348
    %v351 = vmul.f32 %v348, %v350
    %v352 = vsub.f32 1.0, %v351
    %v353 = vmul.f32 %v350, %v352
    %v354 = vadd.f32 %v350, %v353
    %vm355 = vweird.f32 %v348
    %vm356 = vweird.f32 %v350
    %vm357 = vmor %vm355, %vm356
    %v358 = vsel %vm357, %v350, %v354
    %v359 = vand.u32 2147483647, %v348
    %vm360 = vcmp.eq.f32.partialorder %v359, 8.507059e+37
    %v361 = vand.u32 %v348, 2147483648
    %v362 = vor.u32 1.1754944e-38, %v361
    %v363 = vsel %vm360, %v362, %v358
    %v364 = vmul.f32 %v336, %v363
    %v365 = vmax.f32 %v316, %v364
    %vm366 = vcmp.le.f32.partialorder %v365, 0.5
    %v367 = vsel %vm366, 1, 0
    %v368 = vcvt.s32.f32 %v367
    %v369 = vmul.f32 %v110, %v368
    %v370 = vsub.f32 1.0, %v71
    %v371 = vlog2.pop %v370
    %v372 = vmul.f32 %v371, 0.6931472
    %v373 = vmax.f32 %v372, -100.0
    %v374 = vsub.f32 0.0, %v373
    %v376 = vrot.slane %v369, 4
    %v378 = vmul.f32 %v374, %v376
    %v380 = vrot.slane %v378, 4
    %vm382 = vcmask 1040384
    %v383 = vsel %vm382, %v380, 0.0
    %384 = vadd.xlane.f32.xlu0 %v383
    %v385 = vpop.xlane.xlu0 %384
    %v386 = vrot.slane %v385, 4
    %v387 = vadd.f32 %v385, %v386
    %v388 = vrot.slane %v387, 2
    %v389 = vadd.f32 %v387, %v388
    %v390 = vrot.slane %v389, 1
    %v391 = vadd.f32 %v389, %v390
    %s392 = vtos %v391
    %v393 = vmul.f32 %v71, %v376
    %v395 = vrot.slane %v393, 4
    %v397 = vsel %vm382, %v395, 0.0
    %398 = vadd.xlane.f32.xlu0 %v397
    %v399 = vpop.xlane.xlu0 %398
    %v400 = vrot.slane %v399, 4
    %v401 = vadd.f32 %v399, %v400
    %v402 = vrot.slane %v401, 2
    %v403 = vadd.f32 %v401, %v402
    %v404 = vrot.slane %v403, 1
    %v405 = vadd.f32 %v403, %v404
    %s406 = vtos %v405
    %v407 = vsel %vm382, %v369, 0.0
    %408 = vadd.xlane.f32.xlu0 %v407
    %v409 = vpop.xlane.xlu0 %408
    %v410 = vrot.slane %v409, 4
    %v411 = vadd.f32 %v409, %v410
    %v412 = vrot.slane %v411, 2
    %v413 = vadd.f32 %v411, %v412
    %v414 = vrot.slane %v413, 1
    %v415 = vadd.f32 %v413, %v414
    %s416 = vtos %v415
    %vm417 = vcmp.gt.f32.partialorder %v71, 0.5
    %v419 = vrot.slane %v97, 4
    %v421 = vsel %vm417, %v419, 0.0
    %v423 = vrot.slane %v421, 4
    %v425 = vsel %vm382, %v423, 0.0
    %426 = vadd.xlane.f32.xlu0 %v425
    %v427 = vpop.xlane.xlu0 %426
    %v428 = vrot.slane %v427, 4
    %v429 = vadd.f32 %v427, %v428
    %v430 = vrot.slane %v429, 2
    %v431 = vadd.f32 %v429, %v430
    %v432 = vrot.slane %v431, 1
    %v433 = vadd.f32 %v431, %v432
    %s434 = vtos %v433
    %v435 = vlaneseq
    %v436 = vand.u32 %v435, 127
    %vm437 = vcmp.eq.s32.totalorder %v436, 0
    %v438 = vstv %s392
    %v439 = vsel %vm437, %v438, 0.0
    %vm440 = vcmp.eq.s32.totalorder %v436, 1
    %v441 = vstv %s406
    %v442 = vsel %vm440, %v441, 0.0
    %v443 = vadd.f32 %v439, %v442
    %vm444 = vcmp.eq.s32.totalorder %v436, 2
    %v445 = vstv %s416
    %v446 = vsel %vm444, %v445, 0.0
    %v447 = vadd.f32 %v443, %v446
    %vm448 = vcmp.eq.s32.totalorder %v436, 3
    %v449 = vstv %s434
    %v450 = vsel %vm448, %v449, 0.0
    %v451 = vadd.f32 %v447, %v450
    %452 = vst [vmem:[#allocation10] sm:$0x1] %v451
    // Predicated region
    $region26: #{tpu_custom_call.1} parent=1 // pred_check
      _
    $region27: #{tpu_custom_call.1} parent=1 // pred_check_branch
      %454 = sbr.rel (0) target = $region29
    $region28: #{tpu_custom_call.1} parent=1 // pred_region
      %456 = vsyncadd [#allocation4], 0
      %s457 = sshll.u32 [#allocation7], 4
      %s458 = int_to_ptr.vmem [resolvable:$true] %s457
      %s459 = sshll.u32 %s4, 4
      %s460 = int_to_ptr.hbm [resolvable:$true] %s459
      %465 = dma.vmem_to_hbm [thread:$0]  %s458, 256, %s460, [#allocation4], 128, 128, 8
    $region29: #{tpu_custom_call.1} parent=1 // pred_fallthru
      _
    // Predicated region
    $region30: #{tpu_custom_call.1} parent=1 // pred_check
      _
    $region31: #{tpu_custom_call.1} parent=1 // pred_check_branch
      %467 = sbr.rel (0) target = $region33
    $region32: #{tpu_custom_call.1} parent=1 // pred_region
      %469 = vsyncadd [#allocation9], 0
      %s471 = sshll.u32 [#allocation8], 4
      %s472 = int_to_ptr.vmem [resolvable:$true] %s471
      %s473 = sshll.u32 %s5, 4
      %s474 = int_to_ptr.hbm [resolvable:$true] %s473
      %476 = dma.vmem_to_hbm [thread:$0]  %s472, 64, %s474, [#allocation9]
    $region33: #{tpu_custom_call.1} parent=1 // pred_fallthru
      _
    // Predicated region
    $region34: #{tpu_custom_call.1} parent=1 // pred_check
      _
    $region35: #{tpu_custom_call.1} parent=1 // pred_check_branch
      %478 = sbr.rel (0) target = $region37
    $region36: #{tpu_custom_call.1} parent=1 // pred_region
      %480 = vsyncadd [#allocation9], 0
      %s482 = sshll.u32 [#allocation10], 4
      %s483 = int_to_ptr.vmem [resolvable:$true] %s482
      %s484 = sshll.u32 %s6, 4
      %s485 = int_to_ptr.hbm [resolvable:$true] %s484
      %487 = dma.vmem_to_hbm [thread:$0]  %s483, 16, %s485, [#allocation9]
    $region37: #{tpu_custom_call.1} parent=1 // pred_fallthru
      _
    // Predicated region
    $region38: #{tpu_custom_call.1} parent=1 // pred_check
      _
    $region39: #{tpu_custom_call.1} parent=1 // pred_check_branch
      %489 = sbr.rel (0) target = $region41
    $region40: #{tpu_custom_call.1} parent=1 // pred_region
      %491 = dma.done [#allocation4], 256
    $region41: #{tpu_custom_call.1} parent=1 // pred_fallthru
      _
    // Predicated region
    $region42: #{tpu_custom_call.1} parent=1 // pred_check
      _
    $region43: #{tpu_custom_call.1} parent=1 // pred_check_branch
      %493 = sbr.rel (0) target = $region45
    $region44: #{tpu_custom_call.1} parent=1 // pred_region
      %495 = dma.done [#allocation9], 64
    $region45: #{tpu_custom_call.1} parent=1 // pred_fallthru
      _
    // Predicated region
    $region46: #{tpu_custom_call.1} parent=1 // pred_check
      _
    $region47: #{tpu_custom_call.1} parent=1 // pred_check_branch
      %497 = sbr.rel (0) target = $region49
    $region48: #{tpu_custom_call.1} parent=1 // pred_region
      %499 = dma.done [#allocation9], 16
    $region49: #{tpu_custom_call.1} parent=1 // pred_fallthru
      _
    %500 = vsyncpa [#allocation3], 1
    %501 = vsyncpa [#allocation4], 1
    %502 = vsyncpa [#allocation9], 1
    %503 = vsyncpa [#allocation5], 1

</llo_original>
